<compile_context>
chip_gen: v5e
topology: v5e:2x2
jax: 0.10.0
libtpu: 0.0.40
codegen_flags: <defaults>
</compile_context>

<pallas_src>
import jax
import jax.numpy as jnp
from jax.experimental import pallas as pl
from jax.experimental.pallas import tpu as pltpu


def _round_up(x, m):
    return (x + m - 1) // m * m


def _choose_tm(batch, cap=1024):
    """Batch-tile rows.

    - multiple of 8 (sublane), or the full batch when batch < 8 (block == full
      array dim is always legal),
    - >= 2 grid tiles whenever batch > 8 (v7x 2-TC sharding + DMA/compute
      pipelining),
    - capped at `cap` rows to bound the VMEM footprint.
    """
    if batch <= 8:
        return batch
    tm = _round_up(pl.cdiv(batch, 2), 8)
    return min(cap, tm)


def _fused_heads_kernel(x_ref, w_ref, b_ref, out_ref):
    """All task heads at once: one MXU matmul against the concatenated slab."""
    x = x_ref[...]                                   # [tm, D]
    if x.dtype != w_ref.dtype:
        x = x.astype(w_ref.dtype)                    # bf16 inputs -> native MXU path
    y = jnp.dot(x, w_ref[...], preferred_element_type=jnp.float32)   # [tm, N_pad] f32
    out_ref[...] = (y + b_ref[...]).astype(out_ref.dtype)


def fused_task_heads(data, w_cat, b_cat, *, block_rows=1024):
    """data: [B, D] float, w_cat: [D, N_pad] bf16/f32, b_cat: [1, N_pad] f32 -> [B, N_pad] f32."""
    B, D = data.shape
    n_pad = w_cat.shape[1]

    tm = _choose_tm(B, cap=block_rows)
    grid = (pl.cdiv(B, tm),)                         # partial last tile allowed; no host pad

    return pl.pallas_call(
        _fused_heads_kernel,
        out_shape=jax.ShapeDtypeStruct((B, n_pad), jnp.float32),
        grid_spec=pltpu.PrefetchScalarGridSpec(
            num_scalar_prefetch=0,
            grid=grid,
            in_specs=[
                pl.BlockSpec((tm, D), lambda i: (i, 0)),       # activations tile
                pl.BlockSpec((D, n_pad), lambda i: (0, 0)),    # weight slab (resident, never re-fetched)
                pl.BlockSpec((1, n_pad), lambda i: (0, 0)),    # bias slab   (resident)
            ],
            out_specs=pl.BlockSpec((tm, n_pad), lambda i: (i, 0)),
        ),
        compiler_params=pltpu.CompilerParams(
            dimension_semantics=("parallel",),       # shard batch tiles across TCs (v7x)
        ),
    )(data, w_cat, b_cat)


class MultitaskClassifierPallas:
    """JAX/Pallas port of MultitaskClassifier (eval-mode forward)."""

    def __init__(self, task_targets, in_dim=768, p_dropout=0.1, random_state=0,
                 param_dtype=jnp.bfloat16):
        self._task_targets = task_targets
        self._in_dim = in_dim
        self._p_dropout = p_dropout

        key = jax.random.PRNGKey(random_state)
        self.weights = []          # per-task [D, n_out] f32 master copies (transpose of nn.Linear)
        self.biases = []           # per-task [1, n_out] f32
        self.n_outs = []
        bound = 1.0 / (in_dim ** 0.5)   # matches torch.nn.Linear default init range
        for _task_id, task_labels in task_targets.items():
            n_out = len(task_labels)
            kw, kb, key = jax.random.split(key, 3)
            self.weights.append(
                jax.random.uniform(kw, (in_dim, n_out), jnp.float32, -bound, bound))
            self.biases.append(
                jax.random.uniform(kb, (1, n_out), jnp.float32, -bound, bound))
            self.n_outs.append(n_out)

        # Fused, 128-lane-padded weight/bias slabs (built once at init).
        total = sum(self.n_outs)
        n_pad = max(128, _round_up(total, 128))      # keep minimal lane-dense width
        w_cat = jnp.concatenate(self.weights, axis=1)
        b_cat = jnp.concatenate(self.biases, axis=1)
        self.w_cat = jnp.pad(w_cat, ((0, 0), (0, n_pad - total))).astype(param_dtype)
        self.b_cat = jnp.pad(b_cat, ((0, 0), (0, n_pad - total))).astype(jnp.float32)
        self.n_pad = n_pad

        # (offset, size) metadata per task for lazy slicing at the consumer.
        self.task_slices = []
        off = 0
        for n in self.n_outs:
            self.task_slices.append((off, n))
            off += n

        self._forward_fused_jit = jax.jit(self._forward_fused_impl)

    # ---- jitted performance path -------------------------------------------
    def _forward_fused_impl(self, data, task_ids):
        # TODO(synk): dropout is applied in eval mode (identity); train-mode dropout
        # with a PyTorch-identical RNG stream is not reproducible here.
        fused = fused_task_heads(data, self.w_cat, self.b_cat)        # [B, N_pad] f32
        n_tasks = len(self.n_outs)
        mask_matrix = (task_ids[:, None]
                       == jnp.arange(n_tasks, dtype=task_ids.dtype)[None, :])  # [B, T] bool
        return fused, mask_matrix

    def forward_fused(self, data, task_ids):
        """Preferred path: fused [B, N_pad] logits, [B, T] mask matrix, (offset, size) per task."""
        fused, mask_matrix = self._forward_fused_jit(data, task_ids)
        return fused, mask_matrix, self.task_slices

    # ---- module-compatible path --------------------------------------------
    def forward(self, data, task_ids):
        """Returns (list of per-task logits, list of per-task masks) like the PyTorch module.
        Per-task slicing is done lazily outside the jitted graph (lane-sparse copies)."""
        fused, mask_matrix, slices = self.forward_fused(data, task_ids)
        outputs = [fused[:, off:off + n] for (off, n) in slices]
        task_masks = [mask_matrix[:, t] for t in range(len(slices))]
        return outputs, task_masks


if __name__ == "__main__":
    # Small, module-consistent shapes: batch=8, in_dim=32, three tasks with
    # 4, 6, and 2 labels respectively.
    task_targets = {
        "task_a": ["l0", "l1", "l2", "l3"],
        "task_b": ["l0", "l1", "l2", "l3", "l4", "l5"],
        "task_c": ["neg", "pos"],
    }
    B, D = 8, 32

    key = jax.random.PRNGKey(0)
    kd, kt = jax.random.split(key)
    data = jax.random.normal(kd, (B, D), dtype=jnp.float32)
    task_ids = jax.random.randint(kt, (B,), 0, len(task_targets), dtype=jnp.int32)

    model = MultitaskClassifierPallas(task_targets, in_dim=D,
                                      p_dropout=0.1, random_state=0)
    outputs, task_masks = model.forward(data, task_ids)

    # Block on results.
    outputs = [jax.block_until_ready(o) for o in outputs]
    task_masks = [jax.block_until_ready(m) for m in task_masks]

    # Reference check: plain-JAX heads with the SAME bf16-rounded weights and
    # activations, f32 accumulation (mirrors the kernel's numerics).
    ok = True
    x_bf = data.astype(jnp.bfloat16).astype(jnp.float32)
    for tid, (w, b, n) in enumerate(zip(model.weights, model.biases, model.n_outs)):
        w_bf = w.astype(jnp.bfloat16).astype(jnp.float32)
        ref_out = x_bf @ w_bf + b
        ref_mask = task_ids == tid
        ok &= bool(jnp.allclose(outputs[tid], ref_out, atol=1e-3, rtol=1e-3))
        ok &= bool(jnp.array_equal(task_masks[tid], ref_mask))
        ok &= outputs[tid].shape == (B, n)

    if ok:
        print("KERNEL_OK")
    else:
        print("KERNEL_MISMATCH")
</pallas_src>

<mosaic_0001>
module attributes {stable_mosaic.version = 11 : i64} {
  func.func @_fused_heads_kernel(%arg0: i32, %arg1: memref<8x32xf32, #tpu.memory_space<vmem>>, %arg2: memref<32x128xbf16, #tpu.memory_space<vmem>>, %arg3: memref<1x128xf32, #tpu.memory_space<vmem>>, %arg4: memref<8x128xf32, #tpu.memory_space<vmem>>) attributes {dimension_semantics = [#tpu.dimension_semantics<parallel>], iteration_bounds = array<i64: 1>, scalar_prefetch = 0 : i64, scratch_operands = 0 : i64, tpu.core_type = #tpu.core_type<tc>, window_params = [{transform_indices = @transform_0, window_bounds = array<i64: 8, 32>}, {pipeline_mode = #tpu.pipeline_mode<synchronous>, transform_indices = @transform_1, window_bounds = array<i64: 32, 128>}, {pipeline_mode = #tpu.pipeline_mode<synchronous>, transform_indices = @transform_2, window_bounds = array<i64: 1, 128>}, {transform_indices = @transform_3, window_bounds = array<i64: 8, 128>}]} {
    %c0 = arith.constant 0 : index
    %c0_0 = arith.constant 0 : index
    %0 = vector.load %arg1[%c0, %c0_0] : memref<8x32xf32, #tpu.memory_space<vmem>>, vector<8x32xf32>
    %1 = arith.truncf %0 : vector<8x32xf32> to vector<8x32xbf16>
    %c0_1 = arith.constant 0 : index
    %c0_2 = arith.constant 0 : index
    %2 = vector.load %arg2[%c0_1, %c0_2] : memref<32x128xbf16, #tpu.memory_space<vmem>>, vector<32x128xbf16>
    %cst = arith.constant dense<0.000000e+00> : vector<8x128xf32>
    %3 = tpu.matmul %1, %2, %cst {dimension_numbers = #tpu.dot_dimension_numbers<[1], [0], [0], [1], [0, 0, 1, 1], [], []>} : vector<8x32xbf16>, vector<32x128xbf16>, vector<8x128xf32> -> vector<8x128xf32>
    %c0_3 = arith.constant 0 : index
    %c0_4 = arith.constant 0 : index
    %4 = vector.load %arg3[%c0_3, %c0_4] : memref<1x128xf32, #tpu.memory_space<vmem>>, vector<1x128xf32>
    %5 = vector.broadcast %4 : vector<1x128xf32> to vector<8x128xf32>
    %6 = arith.addf %3, %5 : vector<8x128xf32>
    %c0_5 = arith.constant 0 : index
    %c0_6 = arith.constant 0 : index
    %7 = vector.load %arg4[%c0_5, %c0_6] : memref<8x128xf32, #tpu.memory_space<vmem>>, vector<8x128xf32>
    tpu.vector_store %arg4[%c0_5, %c0_6], %6 {strides = array<i32>} : memref<8x128xf32, #tpu.memory_space<vmem>>, vector<8x128xf32>,
    return
  }
  func.func @transform_0(%arg0: i32) -> (i32, i32) {
    %c0_i32 = arith.constant 0 : i32
    %c0_i32_0 = arith.constant 0 : i32
    return %arg0, %c0_i32 : i32, i32
  }
  func.func @transform_1(%arg0: i32) -> (i32, i32) {
    %c0_i32 = arith.constant 0 : i32
    %c0_i32_0 = arith.constant 0 : i32
    %c0_i32_1 = arith.constant 0 : i32
    return %c0_i32, %c0_i32_0 : i32, i32
  }
  func.func @transform_2(%arg0: i32) -> (i32, i32) {
    %c0_i32 = arith.constant 0 : i32
    %c0_i32_0 = arith.constant 0 : i32
    %c0_i32_1 = arith.constant 0 : i32
    return %c0_i32, %c0_i32_0 : i32, i32
  }
  func.func @transform_3(%arg0: i32) -> (i32, i32) {
    %c0_i32 = arith.constant 0 : i32
    %c0_i32_0 = arith.constant 0 : i32
    return %arg0, %c0_i32 : i32, i32
  }
}

</mosaic_0001>

<llo_original>
// kernel: _forward_fused_impl.1
$region0: #{_forward_fused_impl.1}
  #allocation0 [shape = 'u32[]', space=smem, size = 0x4, offset = 0x4, fixed_abs, tag = 'smem constant byte address 0x4 - core index']
  #allocation1 [shape = 'u32[72,128]{1,0:T(1,128)}', space=vmem, size = 0x9000, scoped, tag = 'internal scratch']
  %s0 = inlined_call_operand.hbm [shape: f32[8,32], index: 0, kind: input, shape index: {}]
  %s1 = inlined_call_operand.hbm [shape: bf16[32,128], index: 1, kind: input, shape index: {}]
  %s2 = inlined_call_operand.vmem [shape: f32[1,128], index: 2, kind: input, shape index: {}]
  %s3 = inlined_call_operand.hbm [shape: f32[8,128], index: 3, kind: output, shape index: {}]
  %s4 = sld [smem:[#allocation0]]
  $region30: #{_forward_fused_impl.1} parent=0
    _
  %s6 = ssub.s32 1, %s4
  %s7 = scalar_select 0, %s6, %s4
  $region1: #{_forward_fused_impl.1} parent=0
    #allocation2 [shape = 'u8[4096]{0}', space=vmem, size = 0x1000, scoped, tag = 'input window, operand 0, single buffered']
    #allocation3 [shape = 's32[1]{0}', space=sflag, size = 0x4, scoped, tag = 'scoped memory for _forward_fused_impl.1']
    #allocation4 [shape = 's32[1]{0}', space=sflag, size = 0x4, scoped, tag = 'scoped memory for _forward_fused_impl.1']
    #allocation5 [shape = 'u8[8192]{0}', space=vmem, size = 0x2000, scoped, tag = 'input window, operand 1, single buffered']
    #allocation6 [shape = 's32[1]{0}', space=sflag, size = 0x4, scoped, tag = 'scoped memory for _forward_fused_impl.1']
    #allocation7 [shape = 'u8[4096]{0}', space=vmem, size = 0x1000, scoped, tag = 'output window, operand 0, single buffered']
    %8 = vsyncpa [#allocation3], 0
    %9 = vsyncpa [#allocation6], 0
    %10 = vsyncpa [#allocation4], 0
    // Predicated region
    $region2: #{_forward_fused_impl.1} parent=1 // pred_check
      _
    $region3: #{_forward_fused_impl.1} parent=1 // pred_check_branch
      %12 = sbr.rel (0) target = $region5
    $region4: #{_forward_fused_impl.1} parent=1 // pred_region
      %14 = vsyncadd [#allocation3], 0
      %s16 = sshll.u32 %s0, 4
      %s17 = int_to_ptr.hbm [resolvable:$true] %s16
      %s18 = sshll.u32 [#allocation2], 4
      %s19 = int_to_ptr.vmem [resolvable:$true] %s18
      %21 = dma.hbm_to_vmem [thread:$0]  %s17, 128, %s19, [#allocation3]
    $region5: #{_forward_fused_impl.1} parent=1 // pred_fallthru
      _
    // Predicated region
    $region6: #{_forward_fused_impl.1} parent=1 // pred_check
      _
    $region7: #{_forward_fused_impl.1} parent=1 // pred_check_branch
      %23 = sbr.rel (0) target = $region9
    $region8: #{_forward_fused_impl.1} parent=1 // pred_region
      %25 = vsyncadd [#allocation6], 0
      %s26 = sshll.u32 %s1, 4
      %s27 = int_to_ptr.hbm [resolvable:$true] %s26
      %s28 = sshll.u32 [#allocation5], 4
      %s29 = int_to_ptr.vmem [resolvable:$true] %s28
      %34 = dma.hbm_to_vmem [thread:$0]  %s27, 256, %s29, [#allocation6], 64, 64, 4
    $region9: #{_forward_fused_impl.1} parent=1 // pred_fallthru
      _
    // Predicated region
    $region10: #{_forward_fused_impl.1} parent=1 // pred_check
      _
    $region11: #{_forward_fused_impl.1} parent=1 // pred_check_branch
      %36 = sbr.rel (0) target = $region13
    $region12: #{_forward_fused_impl.1} parent=1 // pred_region
      _
    $region13: #{_forward_fused_impl.1} parent=1 // pred_fallthru
      _
    // Predicated region
    $region14: #{_forward_fused_impl.1} parent=1 // pred_check
      _
    $region15: #{_forward_fused_impl.1} parent=1 // pred_check_branch
      %38 = sbr.rel (0) target = $region17
    $region16: #{_forward_fused_impl.1} parent=1 // pred_region
      %40 = dma.done [#allocation3], 128
    $region17: #{_forward_fused_impl.1} parent=1 // pred_fallthru
      _
    // Predicated region
    $region18: #{_forward_fused_impl.1} parent=1 // pred_check
      _
    $region19: #{_forward_fused_impl.1} parent=1 // pred_check_branch
      %42 = sbr.rel (0) target = $region21
    $region20: #{_forward_fused_impl.1} parent=1 // pred_region
      %44 = dma.done [#allocation6], 256
    $region21: #{_forward_fused_impl.1} parent=1 // pred_fallthru
      _
    %v46 = vld [vmem:[#allocation2] sm:$0xff]
    %v47 = vpack.c.bf16 %v46, %v46
    %v48 = vld [vmem:[#allocation5] sm:$0xf]
    %v49 = vld [vmem:[#allocation5 + $0x4] sm:$0xf]
    %v50 = vld [vmem:[#allocation5 + $0x8] sm:$0xf]
    %v51 = vld [vmem:[#allocation5 + $0xc] sm:$0xf]
    %v52 = vld [vmem:[%s2] sm:$0x1]
    %v54 = vperm.slane %v52, 0
    %v60 = vunpack.c.l.b16 %v48
    %v61 = vunpack.c.l.b16 %v49
    %v62 = vunpack.c.l.b16 %v50
    %v63 = vunpack.c.l.b16 %v51
    %v64 = vpack.c.b16 %v61, %v60
    %v65 = vpack.c.b16 %v63, %v62
    %vm68 = vcmask 261120
    %v70 = vsel %vm68, %v47, 0
    %72 = vmatpush.bf16.msra.mxu0 0
    %73 = vmatpush.bf16.msra.mxu0 0
    %74 = vmatpush.bf16.msra.mxu0 0
    %75 = vmatpush.bf16.msra.mxu0 0
    %76 = vmatpush.bf16.msra.mxu0 0
    %77 = vmatpush.bf16.msra.mxu0 0
    %78 = vmatpush.bf16.msra.mxu0 %v65
    %79 = vmatpush.bf16.msra.mxu0 %v64
    %80 = vmatmul.bf16.gmra.mxu0 %v70
    %v81 = vpop.f32.mrf.mxu0
    %v82 = vadd.f32 %v54, %v81
    %v83 = vpop.f32.mrf.mxu0
    %84 = vdwg.mxu0
    %85 = vst [vmem:[#allocation7] sm:$0xff] %v82
    // Predicated region
    $region22: #{_forward_fused_impl.1} parent=1 // pred_check
      _
    $region23: #{_forward_fused_impl.1} parent=1 // pred_check_branch
      %87 = sbr.rel (0) target = $region25
    $region24: #{_forward_fused_impl.1} parent=1 // pred_region
      %89 = vsyncadd [#allocation4], 0
      %s91 = sshll.u32 [#allocation7], 4
      %s92 = int_to_ptr.vmem [resolvable:$true] %s91
      %s93 = sshll.u32 %s3, 4
      %s94 = int_to_ptr.hbm [resolvable:$true] %s93
      %96 = dma.vmem_to_hbm [thread:$0]  %s92, 128, %s94, [#allocation4]
    $region25: #{_forward_fused_impl.1} parent=1 // pred_fallthru
      _
    // Predicated region
    $region26: #{_forward_fused_impl.1} parent=1 // pred_check
      _
    $region27: #{_forward_fused_impl.1} parent=1 // pred_check_branch
      %98 = sbr.rel (0) target = $region29
    $region28: #{_forward_fused_impl.1} parent=1 // pred_region
      %100 = dma.done [#allocation4], 128
    $region29: #{_forward_fused_impl.1} parent=1 // pred_fallthru
      _
    %101 = vsyncpa [#allocation3], 1
    %102 = vsyncpa [#allocation6], 1
    %103 = vsyncpa [#allocation4], 1

</llo_original>
